<compile_context>
chip_gen: v7x
topology: tpu7x:2x2x1
jax: 0.10.0
libtpu: 0.0.40
codegen_flags: <defaults>
</compile_context>

<pallas_src>
import jax
import jax.numpy as jnp
from jax.experimental import pallas as pl
from jax.experimental.pallas import tpu as pltpu

LN_EPS = 1e-5  # torch.nn.LayerNorm default


# ----------------------------------------------------------------------------
# helpers
# ----------------------------------------------------------------------------
def _round_up(n, m):
    return ((n + m - 1) // m) * m


def _cdiv(a, b):
    return -(-a // b)


def _choose_tiles(batch, tb_max):
    """Lane-dense batch tiling: tile is a multiple of 128 lanes, padding minimized,
    and >=2 grid steps once b_pad >= 2048 (dual-TC occupancy on v7x)."""
    b_pad = _round_up(max(batch, 128), 128)
    n_steps = _cdiv(b_pad, tb_max)
    if b_pad >= 2048:
        n_steps = max(n_steps, 2)
    tb_eff = _round_up(_cdiv(b_pad, n_steps), 128)
    b_pad = _round_up(b_pad, tb_eff)
    return b_pad, tb_eff


def _pad_lanes(x_t, b_pad):
    """x_t: (feat, B) -> zero-pad lanes (batch) to b_pad."""
    feat, b = x_t.shape
    if b == b_pad:
        return x_t
    return jnp.pad(x_t, ((0, 0), (0, b_pad - b)))


def _vpu_matmul(w, x):
    """(m, k) @ (k, tb) for tiny k as VPU broadcast-FMAs (skips MXU push/pop)."""
    k = w.shape[1]
    acc = w[:, 0:1] * x[0:1, :]
    for j in range(1, k):
        acc = acc + w[:, j:j + 1] * x[j:j + 1, :]
    return acc


def _ln_tanh(h, pb):
    """LayerNorm (feature axis 0) + affine + tanh. pb: (fan_out, 3) = [bias, ln_w, ln_b]."""
    h = h + pb[:, 0:1]
    mu = jnp.mean(h, axis=0, keepdims=True)
    # E[h^2] - mu^2: both reductions depend only on h -> the two XLU reduces can overlap.
    var = jnp.mean(h * h, axis=0, keepdims=True) - mu * mu
    hn = (h - mu) * jax.lax.rsqrt(var + LN_EPS)
    return jnp.tanh(hn * pb[:, 1:2] + pb[:, 2:3])


# ----------------------------------------------------------------------------
# Parameter folding (done once at init; results are closed over as jit constants)
# ----------------------------------------------------------------------------
def fold_net_params(net_params):
    """Pack all LNMLP layers into one weight blob and one [bias|ln_w|ln_b] blob."""
    layers = list(net_params)
    sizes = (int(layers[0][0].shape[1]),) + tuple(int(w.shape[0]) for w, _ in layers)
    max_in = max(int(w.shape[1]) for w, _ in layers)
    n_rows = sum(int(w.shape[0]) for w, _ in layers)
    wblob = jnp.zeros((n_rows, max_in), jnp.float32)
    pblob = jnp.zeros((n_rows, 3), jnp.float32)
    row = 0
    for w, p in layers:
        fo, fi = int(w.shape[0]), int(w.shape[1])
        wblob = wblob.at[row:row + fo, :fi].set(w)
        pblob = pblob.at[row:row + fo, :int(p.shape[1])].set(p)
        row += fo
    return wblob, pblob, sizes


def fold_quad_params(qp):
    """Pack all quadratic-lag weights into one (6, 31) blob:
    [Ws | Wsmin | Wsmax | sum_h Wc | sum_h Wcmin | sum_h Wcmax | bs].
    Pre-summing over H is exact because the source's loop variable h never increments,
    so every horizon term uses the same u0 = data_batch[:, 0, :4]."""
    wc = jnp.sum(qp["wc"], axis=0)
    wcmin = jnp.sum(qp["wcmin"], axis=0)
    wcmax = jnp.sum(qp["wcmax"], axis=0)
    return jnp.concatenate(
        [qp["ws"], qp["wsmin"], qp["wsmax"], wc, wcmin, wcmax, qp["bs"]], axis=1)


# ----------------------------------------------------------------------------
# LNMLP kernel (self.net path, quadlag=False)
# x layout: (in_dim, tb) lane-dense; weights in PyTorch (out, in) orientation so each
# layer is W @ x; LayerNorm is over the feature axis (axis 0 here).
# ----------------------------------------------------------------------------
def _make_lnmlp_kernel(sizes, md):
    n_layers = len(sizes) - 1

    def kernel(x_ref, w_ref, p_ref, out_ref):
        w = w_ref[...]                           # (sum fan_out, max fan_in) f32 blob
        p = p_ref[...]                           # (sum fan_out, 3) f32 blob
        h = x_ref[...]                           # (in_dim, tb), dtype md
        row = 0
        for li in range(n_layers):
            fan_in, fan_out = sizes[li], sizes[li + 1]
            wl = w[row:row + fan_out, :fan_in].astype(md)
            hl = jnp.dot(wl, h.astype(md), preferred_element_type=jnp.float32)
            pb = p[row:row + fan_out, :]
            if li < n_layers - 1:
                h = _ln_tanh(hl, pb)             # LN/tanh math stays f32
            else:
                h = hl + pb[:, 0:1]              # final Linear: bias only
            row += fan_out
        out_ref[...] = h.astype(out_ref.dtype)

    return kernel


def _lnmlp_call(data_batch, wblob, pblob, sizes, *, tb_max, matmul_dtype):
    batch = data_batch.shape[0]
    in_dim, out_dim = sizes[0], sizes[-1]
    b_pad, tb_eff = _choose_tiles(batch, tb_max)

    # Reshape is free; transpose+cast+pad fuse into one copy inside the jitted graph.
    x_t = data_batch.reshape(batch, -1).T.astype(matmul_dtype)   # (in_dim, B)
    x_t = _pad_lanes(x_t, b_pad)                                 # (in_dim, b_pad)

    kernel = _make_lnmlp_kernel(sizes, matmul_dtype)
    grid_spec = pltpu.PrefetchScalarGridSpec(
        num_scalar_prefetch=0,
        grid=(b_pad // tb_eff,),
        in_specs=[
            pl.BlockSpec((in_dim, tb_eff), lambda i: (0, i)),
            pl.BlockSpec(wblob.shape, lambda i: (0, 0)),
            pl.BlockSpec(pblob.shape, lambda i: (0, 0)),
        ],
        out_specs=pl.BlockSpec((out_dim, tb_eff), lambda i: (0, i)),
    )
    out_t = pl.pallas_call(
        kernel,
        out_shape=jax.ShapeDtypeStruct((out_dim, b_pad), data_batch.dtype),
        grid_spec=grid_spec,
        compiler_params=pltpu.CompilerParams(dimension_semantics=("parallel",)),
    )(x_t, wblob, pblob)
    return out_t[:, :batch].T


# ----------------------------------------------------------------------------
# Quadratic-lag kernel (quadlag=True)
# x packed as (10, tb): rows 0:4 = u0 (controls at step 0), rows 4:10 = s (state at
# the last step). w blob (6, 31) as documented in fold_quad_params.
# ----------------------------------------------------------------------------
def quadlag_kernel(x_ref, w_ref, out_ref):
    x = x_ref[...]                                # (10, tb)
    w = w_ref[...]                                # (6, 31)
    u = x[0:4, :]
    s = x[4:10, :]

    s_min2 = jnp.minimum(s, 0.0) ** 2
    s_max2 = jnp.maximum(s * s, 0.0) ** 2         # == s**4, kept in source form
    u_min2 = jnp.minimum(u, 0.0) ** 2
    u_max2 = jnp.maximum(u, 0.0) ** 2

    pred = (_vpu_matmul(w[:, 0:6], s)
            + _vpu_matmul(w[:, 6:12], s_min2)
            + _vpu_matmul(w[:, 12:18], s_max2)
            + _vpu_matmul(w[:, 18:22], u)
            + _vpu_matmul(w[:, 22:26], u_min2)
            + _vpu_matmul(w[:, 26:30], u_max2)
            + w[:, 30:31])
    out_ref[...] = pred.astype(out_ref.dtype)


def _quadlag_call(data_batch, w_quad, *, tb_max):
    batch = data_batch.shape[0]
    b_pad, tb_eff = _choose_tiles(batch, tb_max)

    # Single packed input: slice+concat+transpose+pad fuse inside the jitted graph.
    packed = jnp.concatenate(
        [data_batch[:, 0, :4], data_batch[:, -1, 4:]], axis=1).T   # (10, B)
    packed = _pad_lanes(packed.astype(jnp.float32), b_pad)

    grid_spec = pltpu.PrefetchScalarGridSpec(
        num_scalar_prefetch=0,
        grid=(b_pad // tb_eff,),
        in_specs=[
            pl.BlockSpec((10, tb_eff), lambda i: (0, i)),
            pl.BlockSpec(w_quad.shape, lambda i: (0, 0)),
        ],
        out_specs=pl.BlockSpec((6, tb_eff), lambda i: (0, i)),
    )
    out_t = pl.pallas_call(
        quadlag_kernel,
        out_shape=jax.ShapeDtypeStruct((6, b_pad), data_batch.dtype),
        grid_spec=grid_spec,
        compiler_params=pltpu.CompilerParams(dimension_semantics=("parallel",)),
    )(packed, w_quad)
    return out_t[:, :batch].T


# ----------------------------------------------------------------------------
# Module-level forward factory: folds params once, returns a jitted forward.
# ----------------------------------------------------------------------------
def make_quadratic_lag(net_params, quad_params, *, quadlag, tb_max=4096,
                       matmul_dtype=jnp.float32):
    """Mirror of QuadraticLag.forward. matmul_dtype=jnp.bfloat16 is the v6e/v7x MXU
    operand path (LN/tanh stay f32); default f32 preserves 1e-4 parity with torch."""
    wblob, pblob, sizes = fold_net_params(net_params)
    w_quad = fold_quad_params(quad_params) if quad_params is not None else None

    @jax.jit
    def forward(data_batch):
        if quadlag:
            # The source computes self.net(...) here and immediately overwrites `pred`;
            # the dead net evaluation is skipped (output-identical, less work).
            return _quadlag_call(data_batch, w_quad, tb_max=tb_max)
        return _lnmlp_call(data_batch, wblob, pblob, sizes,
                           tb_max=tb_max, matmul_dtype=matmul_dtype)

    return forward


# ----------------------------------------------------------------------------
# Deterministic synthetic parameters + pure-JAX reference
# ----------------------------------------------------------------------------
def init_net_params(key, in_dim, hidden_sizes, out_dim):
    """LNMLP weights in PyTorch (out, in) orientation; [bias, ln_w, ln_b] packed per layer."""
    sizes = [in_dim] + list(hidden_sizes)
    keys = jax.random.split(key, len(hidden_sizes) + 1)
    layers = []
    for li, (fan_in, fan_out) in enumerate(zip(sizes[:-1], sizes[1:])):
        kw, kb, kg, kbe = jax.random.split(keys[li], 4)
        w = jax.random.normal(kw, (fan_out, fan_in), jnp.float32) / jnp.sqrt(jnp.float32(fan_in))
        b = 0.1 * jax.random.normal(kb, (fan_out,), jnp.float32)
        g = 1.0 + 0.1 * jax.random.normal(kg, (fan_out,), jnp.float32)
        be = 0.1 * jax.random.normal(kbe, (fan_out,), jnp.float32)
        layers.append((w, jnp.stack([b, g, be], axis=1)))        # p: (fan_out, 3)
    kw, kb = jax.random.split(keys[-1], 2)
    w2 = jax.random.normal(kw, (out_dim, sizes[-1]), jnp.float32) / jnp.sqrt(jnp.float32(sizes[-1]))
    b2 = 0.1 * jax.random.normal(kb, (out_dim, 1), jnp.float32)
    layers.append((w2, b2))
    return tuple(layers)


def init_quadlag_params(key, H):
    ks = jax.random.split(key, 7)

    def n(k, shape, scale):
        return scale * jax.random.normal(k, shape, jnp.float32)

    return dict(
        ws=n(ks[0], (6, 6), 0.4), bs=n(ks[1], (6, 1), 0.1),
        wsmin=n(ks[2], (6, 6), 0.4), wsmax=n(ks[3], (6, 6), 0.4),
        wc=n(ks[4], (H, 6, 4), 0.5), wcmin=n(ks[5], (H, 6, 4), 0.5),
        wcmax=n(ks[6], (H, 6, 4), 0.5),
    )


def reference_forward(data_batch, net_params, quad_params, *, quadlag):
    """Pure-JAX transcription of QuadraticLag.forward (including the h=0 loop quirk)."""
    batch = data_batch.shape[0]
    x = data_batch.reshape(batch, -1)
    (w0, p0), (w1, p1), (w2, b2) = net_params

    def block(x, w, p):
        h = x @ w.T + p[:, 0]
        mu = h.mean(-1, keepdims=True)
        var = ((h - mu) ** 2).mean(-1, keepdims=True)
        h = (h - mu) / jnp.sqrt(var + LN_EPS) * p[:, 1] + p[:, 2]
        return jnp.tanh(h)

    pred = block(x, w0, p0)
    pred = block(pred, w1, p1)
    pred = pred @ w2.T + b2[:, 0]

    if quadlag:
        s = data_batch[:, -1, 4:]
        pred = (s @ quad_params["ws"].T + quad_params["bs"][:, 0]
                + jnp.minimum(s, 0.0) ** 2 @ quad_params["wsmin"].T
                + jnp.maximum(s ** 2, 0.0) ** 2 @ quad_params["wsmax"].T)
        h = 0  # matches the source: never incremented
        for hh in range(quad_params["wc"].shape[0]):
            u = data_batch[:, h, :4]
            pred = pred + (u @ quad_params["wc"][hh].T
                           + jnp.minimum(u, 0.0) ** 2 @ quad_params["wcmin"][hh].T
                           + jnp.maximum(u, 0.0) ** 2 @ quad_params["wcmax"][hh].T)
    return pred


if __name__ == "__main__":
    # QuadraticLag(neural_net_kwargs=dict(input_size=T*10, hidden_sizes=(32,32),
    #              output_size=6), H=3, quadlag=...)
    # TODO(synk): LNMLP defaults (activation='tanh', ln=True) are assumed for self.net;
    # swap activation / disable LayerNorm here if the source repo's nn_utils differs.
    H = 3
    T = H + 1
    F = 10                      # 4 controls + 6 state components per step
    batch = 16
    hidden_sizes = (32, 32)
    out_dim = 6

    key = jax.random.PRNGKey(0)
    k_d, k_n, k_q = jax.random.split(key, 3)
    data_batch = jax.random.normal(k_d, (batch, T, F), jnp.float32)
    net_params = init_net_params(k_n, T * F, hidden_sizes, out_dim)
    quad_params = init_quadlag_params(k_q, H)

    for quadlag in (True, False):
        fwd = make_quadratic_lag(net_params, quad_params, quadlag=quadlag)
        out = jax.block_until_ready(fwd(data_batch))
        ref = reference_forward(data_batch, net_params, quad_params, quadlag=quadlag)
        assert out.shape == ref.shape == (batch, out_dim)
        assert jnp.allclose(out, ref, atol=1e-4, rtol=1e-4), (
            quadlag, float(jnp.max(jnp.abs(out - ref))))

    # bf16 MXU-operand variant (v6e/v7x path); LN/tanh stay f32, looser tolerance.
    fwd_bf16 = make_quadratic_lag(net_params, quad_params, quadlag=False,
                                  matmul_dtype=jnp.bfloat16)
    out_bf16 = jax.block_until_ready(fwd_bf16(data_batch))
    ref = reference_forward(data_batch, net_params, quad_params, quadlag=False)
    assert jnp.allclose(out_bf16, ref, atol=5e-2, rtol=5e-2), float(
        jnp.max(jnp.abs(out_bf16 - ref)))

    print("KERNEL_OK")
</pallas_src>

<mosaic_0001>
module attributes {stable_mosaic.version = 11 : i64} {
  func.func @quadlag_kernel(%arg0: i32, %arg1: memref<10x128xf32, #tpu.memory_space<vmem>>, %arg2: memref<6x31xf32, #tpu.memory_space<vmem>>, %arg3: memref<6x128xf32, #tpu.memory_space<vmem>>) attributes {dimension_semantics = [#tpu.dimension_semantics<parallel>], iteration_bounds = array<i64: 1>, scalar_prefetch = 0 : i64, scratch_operands = 0 : i64, tpu.core_type = #tpu.core_type<tc>, window_params = [{transform_indices = @transform_0, window_bounds = array<i64: 10, 128>}, {pipeline_mode = #tpu.pipeline_mode<synchronous>, transform_indices = @transform_1, window_bounds = array<i64: 6, 31>}, {transform_indices = @transform_2, window_bounds = array<i64: 6, 128>}]} {
    %c0 = arith.constant 0 : index
    %c0_0 = arith.constant 0 : index
    %0 = vector.load %arg1[%c0, %c0_0] : memref<10x128xf32, #tpu.memory_space<vmem>>, vector<10x128xf32>
    %c0_1 = arith.constant 0 : index
    %c0_2 = arith.constant 0 : index
    %1 = vector.load %arg2[%c0_1, %c0_2] : memref<6x31xf32, #tpu.memory_space<vmem>>, vector<6x31xf32>
    %2 = vector.extract_strided_slice %0 {offsets = [0, 0], sizes = [4, 128], strides = [1, 1]} : vector<10x128xf32> to vector<4x128xf32>
    %3 = vector.extract_strided_slice %0 {offsets = [4, 0], sizes = [6, 128], strides = [1, 1]} : vector<10x128xf32> to vector<6x128xf32>
    %cst = arith.constant 0.000000e+00 : f32
    %4 = vector.broadcast %cst : f32 to vector<6x128xf32>
    %5 = arith.minimumf %3, %4 : vector<6x128xf32>
    %6 = arith.mulf %5, %5 : vector<6x128xf32>
    %7 = arith.mulf %3, %3 : vector<6x128xf32>
    %cst_3 = arith.constant 0.000000e+00 : f32
    %8 = vector.broadcast %cst_3 : f32 to vector<6x128xf32>
    %9 = arith.maximumf %7, %8 : vector<6x128xf32>
    %10 = arith.mulf %9, %9 : vector<6x128xf32>
    %cst_4 = arith.constant 0.000000e+00 : f32
    %11 = vector.broadcast %cst_4 : f32 to vector<4x128xf32>
    %12 = arith.minimumf %2, %11 : vector<4x128xf32>
    %13 = arith.mulf %12, %12 : vector<4x128xf32>
    %cst_5 = arith.constant 0.000000e+00 : f32
    %14 = vector.broadcast %cst_5 : f32 to vector<4x128xf32>
    %15 = arith.maximumf %2, %14 : vector<4x128xf32>
    %16 = arith.mulf %15, %15 : vector<4x128xf32>
    %17 = vector.extract_strided_slice %1 {offsets = [0, 0], sizes = [6, 6], strides = [1, 1]} : vector<6x31xf32> to vector<6x6xf32>
    %18 = vector.extract_strided_slice %17 {offsets = [0, 0], sizes = [6, 1], strides = [1, 1]} : vector<6x6xf32> to vector<6x1xf32>
    %19 = vector.extract_strided_slice %3 {offsets = [0, 0], sizes = [1, 128], strides = [1, 1]} : vector<6x128xf32> to vector<1x128xf32>
    %20 = vector.broadcast %18 : vector<6x1xf32> to vector<6x128xf32>
    %21 = vector.broadcast %19 : vector<1x128xf32> to vector<6x128xf32>
    %22 = arith.mulf %20, %21 : vector<6x128xf32>
    %23 = vector.extract_strided_slice %17 {offsets = [0, 1], sizes = [6, 1], strides = [1, 1]} : vector<6x6xf32> to vector<6x1xf32>
    %24 = vector.extract_strided_slice %3 {offsets = [1, 0], sizes = [1, 128], strides = [1, 1]} : vector<6x128xf32> to vector<1x128xf32>
    %25 = vector.broadcast %23 : vector<6x1xf32> to vector<6x128xf32>
    %26 = vector.broadcast %24 : vector<1x128xf32> to vector<6x128xf32>
    %27 = arith.mulf %25, %26 : vector<6x128xf32>
    %28 = arith.addf %22, %27 : vector<6x128xf32>
    %29 = vector.extract_strided_slice %17 {offsets = [0, 2], sizes = [6, 1], strides = [1, 1]} : vector<6x6xf32> to vector<6x1xf32>
    %30 = vector.extract_strided_slice %3 {offsets = [2, 0], sizes = [1, 128], strides = [1, 1]} : vector<6x128xf32> to vector<1x128xf32>
    %31 = vector.broadcast %29 : vector<6x1xf32> to vector<6x128xf32>
    %32 = vector.broadcast %30 : vector<1x128xf32> to vector<6x128xf32>
    %33 = arith.mulf %31, %32 : vector<6x128xf32>
    %34 = arith.addf %28, %33 : vector<6x128xf32>
    %35 = vector.extract_strided_slice %17 {offsets = [0, 3], sizes = [6, 1], strides = [1, 1]} : vector<6x6xf32> to vector<6x1xf32>
    %36 = vector.extract_strided_slice %3 {offsets = [3, 0], sizes = [1, 128], strides = [1, 1]} : vector<6x128xf32> to vector<1x128xf32>
    %37 = vector.broadcast %35 : vector<6x1xf32> to vector<6x128xf32>
    %38 = vector.broadcast %36 : vector<1x128xf32> to vector<6x128xf32>
    %39 = arith.mulf %37, %38 : vector<6x128xf32>
    %40 = arith.addf %34, %39 : vector<6x128xf32>
    %41 = vector.extract_strided_slice %17 {offsets = [0, 4], sizes = [6, 1], strides = [1, 1]} : vector<6x6xf32> to vector<6x1xf32>
    %42 = vector.extract_strided_slice %3 {offsets = [4, 0], sizes = [1, 128], strides = [1, 1]} : vector<6x128xf32> to vector<1x128xf32>
    %43 = vector.broadcast %41 : vector<6x1xf32> to vector<6x128xf32>
    %44 = vector.broadcast %42 : vector<1x128xf32> to vector<6x128xf32>
    %45 = arith.mulf %43, %44 : vector<6x128xf32>
    %46 = arith.addf %40, %45 : vector<6x128xf32>
    %47 = vector.extract_strided_slice %17 {offsets = [0, 5], sizes = [6, 1], strides = [1, 1]} : vector<6x6xf32> to vector<6x1xf32>
    %48 = vector.extract_strided_slice %3 {offsets = [5, 0], sizes = [1, 128], strides = [1, 1]} : vector<6x128xf32> to vector<1x128xf32>
    %49 = vector.broadcast %47 : vector<6x1xf32> to vector<6x128xf32>
    %50 = vector.broadcast %48 : vector<1x128xf32> to vector<6x128xf32>
    %51 = arith.mulf %49, %50 : vector<6x128xf32>
    %52 = arith.addf %46, %51 : vector<6x128xf32>
    %53 = vector.extract_strided_slice %1 {offsets = [0, 6], sizes = [6, 6], strides = [1, 1]} : vector<6x31xf32> to vector<6x6xf32>
    %54 = vector.extract_strided_slice %53 {offsets = [0, 0], sizes = [6, 1], strides = [1, 1]} : vector<6x6xf32> to vector<6x1xf32>
    %55 = vector.extract_strided_slice %6 {offsets = [0, 0], sizes = [1, 128], strides = [1, 1]} : vector<6x128xf32> to vector<1x128xf32>
    %56 = vector.broadcast %54 : vector<6x1xf32> to vector<6x128xf32>
    %57 = vector.broadcast %55 : vector<1x128xf32> to vector<6x128xf32>
    %58 = arith.mulf %56, %57 : vector<6x128xf32>
    %59 = vector.extract_strided_slice %53 {offsets = [0, 1], sizes = [6, 1], strides = [1, 1]} : vector<6x6xf32> to vector<6x1xf32>
    %60 = vector.extract_strided_slice %6 {offsets = [1, 0], sizes = [1, 128], strides = [1, 1]} : vector<6x128xf32> to vector<1x128xf32>
    %61 = vector.broadcast %59 : vector<6x1xf32> to vector<6x128xf32>
    %62 = vector.broadcast %60 : vector<1x128xf32> to vector<6x128xf32>
    %63 = arith.mulf %61, %62 : vector<6x128xf32>
    %64 = arith.addf %58, %63 : vector<6x128xf32>
    %65 = vector.extract_strided_slice %53 {offsets = [0, 2], sizes = [6, 1], strides = [1, 1]} : vector<6x6xf32> to vector<6x1xf32>
    %66 = vector.extract_strided_slice %6 {offsets = [2, 0], sizes = [1, 128], strides = [1, 1]} : vector<6x128xf32> to vector<1x128xf32>
    %67 = vector.broadcast %65 : vector<6x1xf32> to vector<6x128xf32>
    %68 = vector.broadcast %66 : vector<1x128xf32> to vector<6x128xf32>
    %69 = arith.mulf %67, %68 : vector<6x128xf32>
    %70 = arith.addf %64, %69 : vector<6x128xf32>
    %71 = vector.extract_strided_slice %53 {offsets = [0, 3], sizes = [6, 1], strides = [1, 1]} : vector<6x6xf32> to vector<6x1xf32>
    %72 = vector.extract_strided_slice %6 {offsets = [3, 0], sizes = [1, 128], strides = [1, 1]} : vector<6x128xf32> to vector<1x128xf32>
    %73 = vector.broadcast %71 : vector<6x1xf32> to vector<6x128xf32>
    %74 = vector.broadcast %72 : vector<1x128xf32> to vector<6x128xf32>
    %75 = arith.mulf %73, %74 : vector<6x128xf32>
    %76 = arith.addf %70, %75 : vector<6x128xf32>
    %77 = vector.extract_strided_slice %53 {offsets = [0, 4], sizes = [6, 1], strides = [1, 1]} : vector<6x6xf32> to vector<6x1xf32>
    %78 = vector.extract_strided_slice %6 {offsets = [4, 0], sizes = [1, 128], strides = [1, 1]} : vector<6x128xf32> to vector<1x128xf32>
    %79 = vector.broadcast %77 : vector<6x1xf32> to vector<6x128xf32>
    %80 = vector.broadcast %78 : vector<1x128xf32> to vector<6x128xf32>
    %81 = arith.mulf %79, %80 : vector<6x128xf32>
    %82 = arith.addf %76, %81 : vector<6x128xf32>
    %83 = vector.extract_strided_slice %53 {offsets = [0, 5], sizes = [6, 1], strides = [1, 1]} : vector<6x6xf32> to vector<6x1xf32>
    %84 = vector.extract_strided_slice %6 {offsets = [5, 0], sizes = [1, 128], strides = [1, 1]} : vector<6x128xf32> to vector<1x128xf32>
    %85 = vector.broadcast %83 : vector<6x1xf32> to vector<6x128xf32>
    %86 = vector.broadcast %84 : vector<1x128xf32> to vector<6x128xf32>
    %87 = arith.mulf %85, %86 : vector<6x128xf32>
    %88 = arith.addf %82, %87 : vector<6x128xf32>
    %89 = arith.addf %52, %88 : vector<6x128xf32>
    %90 = vector.extract_strided_slice %1 {offsets = [0, 12], sizes = [6, 6], strides = [1, 1]} : vector<6x31xf32> to vector<6x6xf32>
    %91 = vector.extract_strided_slice %90 {offsets = [0, 0], sizes = [6, 1], strides = [1, 1]} : vector<6x6xf32> to vector<6x1xf32>
    %92 = vector.extract_strided_slice %10 {offsets = [0, 0], sizes = [1, 128], strides = [1, 1]} : vector<6x128xf32> to vector<1x128xf32>
    %93 = vector.broadcast %91 : vector<6x1xf32> to vector<6x128xf32>
    %94 = vector.broadcast %92 : vector<1x128xf32> to vector<6x128xf32>
    %95 = arith.mulf %93, %94 : vector<6x128xf32>
    %96 = vector.extract_strided_slice %90 {offsets = [0, 1], sizes = [6, 1], strides = [1, 1]} : vector<6x6xf32> to vector<6x1xf32>
    %97 = vector.extract_strided_slice %10 {offsets = [1, 0], sizes = [1, 128], strides = [1, 1]} : vector<6x128xf32> to vector<1x128xf32>
    %98 = vector.broadcast %96 : vector<6x1xf32> to vector<6x128xf32>
    %99 = vector.broadcast %97 : vector<1x128xf32> to vector<6x128xf32>
    %100 = arith.mulf %98, %99 : vector<6x128xf32>
    %101 = arith.addf %95, %100 : vector<6x128xf32>
    %102 = vector.extract_strided_slice %90 {offsets = [0, 2], sizes = [6, 1], strides = [1, 1]} : vector<6x6xf32> to vector<6x1xf32>
    %103 = vector.extract_strided_slice %10 {offsets = [2, 0], sizes = [1, 128], strides = [1, 1]} : vector<6x128xf32> to vector<1x128xf32>
    %104 = vector.broadcast %102 : vector<6x1xf32> to vector<6x128xf32>
    %105 = vector.broadcast %103 : vector<1x128xf32> to vector<6x128xf32>
    %106 = arith.mulf %104, %105 : vector<6x128xf32>
    %107 = arith.addf %101, %106 : vector<6x128xf32>
    %108 = vector.extract_strided_slice %90 {offsets = [0, 3], sizes = [6, 1], strides = [1, 1]} : vector<6x6xf32> to vector<6x1xf32>
    %109 = vector.extract_strided_slice %10 {offsets = [3, 0], sizes = [1, 128], strides = [1, 1]} : vector<6x128xf32> to vector<1x128xf32>
    %110 = vector.broadcast %108 : vector<6x1xf32> to vector<6x128xf32>
    %111 = vector.broadcast %109 : vector<1x128xf32> to vector<6x128xf32>
    %112 = arith.mulf %110, %111 : vector<6x128xf32>
    %113 = arith.addf %107, %112 : vector<6x128xf32>
    %114 = vector.extract_strided_slice %90 {offsets = [0, 4], sizes = [6, 1], strides = [1, 1]} : vector<6x6xf32> to vector<6x1xf32>
    %115 = vector.extract_strided_slice %10 {offsets = [4, 0], sizes = [1, 128], strides = [1, 1]} : vector<6x128xf32> to vector<1x128xf32>
    %116 = vector.broadcast %114 : vector<6x1xf32> to vector<6x128xf32>
    %117 = vector.broadcast %115 : vector<1x128xf32> to vector<6x128xf32>
    %118 = arith.mulf %116, %117 : vector<6x128xf32>
    %119 = arith.addf %113, %118 : vector<6x128xf32>
    %120 = vector.extract_strided_slice %90 {offsets = [0, 5], sizes = [6, 1], strides = [1, 1]} : vector<6x6xf32> to vector<6x1xf32>
    %121 = vector.extract_strided_slice %10 {offsets = [5, 0], sizes = [1, 128], strides = [1, 1]} : vector<6x128xf32> to vector<1x128xf32>
    %122 = vector.broadcast %120 : vector<6x1xf32> to vector<6x128xf32>
    %123 = vector.broadcast %121 : vector<1x128xf32> to vector<6x128xf32>
    %124 = arith.mulf %122, %123 : vector<6x128xf32>
    %125 = arith.addf %119, %124 : vector<6x128xf32>
    %126 = arith.addf %89, %125 : vector<6x128xf32>
    %127 = vector.extract_strided_slice %1 {offsets = [0, 18], sizes = [6, 4], strides = [1, 1]} : vector<6x31xf32> to vector<6x4xf32>
    %128 = vector.extract_strided_slice %127 {offsets = [0, 0], sizes = [6, 1], strides = [1, 1]} : vector<6x4xf32> to vector<6x1xf32>
    %129 = vector.extract_strided_slice %2 {offsets = [0, 0], sizes = [1, 128], strides = [1, 1]} : vector<4x128xf32> to vector<1x128xf32>
    %130 = vector.broadcast %128 : vector<6x1xf32> to vector<6x128xf32>
    %131 = vector.broadcast %129 : vector<1x128xf32> to vector<6x128xf32>
    %132 = arith.mulf %130, %131 : vector<6x128xf32>
    %133 = vector.extract_strided_slice %127 {offsets = [0, 1], sizes = [6, 1], strides = [1, 1]} : vector<6x4xf32> to vector<6x1xf32>
    %134 = vector.extract_strided_slice %2 {offsets = [1, 0], sizes = [1, 128], strides = [1, 1]} : vector<4x128xf32> to vector<1x128xf32>
    %135 = vector.broadcast %133 : vector<6x1xf32> to vector<6x128xf32>
    %136 = vector.broadcast %134 : vector<1x128xf32> to vector<6x128xf32>
    %137 = arith.mulf %135, %136 : vector<6x128xf32>
    %138 = arith.addf %132, %137 : vector<6x128xf32>
    %139 = vector.extract_strided_slice %127 {offsets = [0, 2], sizes = [6, 1], strides = [1, 1]} : vector<6x4xf32> to vector<6x1xf32>
    %140 = vector.extract_strided_slice %2 {offsets = [2, 0], sizes = [1, 128], strides = [1, 1]} : vector<4x128xf32> to vector<1x128xf32>
    %141 = vector.broadcast %139 : vector<6x1xf32> to vector<6x128xf32>
    %142 = vector.broadcast %140 : vector<1x128xf32> to vector<6x128xf32>
    %143 = arith.mulf %141, %142 : vector<6x128xf32>
    %144 = arith.addf %138, %143 : vector<6x128xf32>
    %145 = vector.extract_strided_slice %127 {offsets = [0, 3], sizes = [6, 1], strides = [1, 1]} : vector<6x4xf32> to vector<6x1xf32>
    %146 = vector.extract_strided_slice %2 {offsets = [3, 0], sizes = [1, 128], strides = [1, 1]} : vector<4x128xf32> to vector<1x128xf32>
    %147 = vector.broadcast %145 : vector<6x1xf32> to vector<6x128xf32>
    %148 = vector.broadcast %146 : vector<1x128xf32> to vector<6x128xf32>
    %149 = arith.mulf %147, %148 : vector<6x128xf32>
    %150 = arith.addf %144, %149 : vector<6x128xf32>
    %151 = arith.addf %126, %150 : vector<6x128xf32>
    %152 = vector.extract_strided_slice %1 {offsets = [0, 22], sizes = [6, 4], strides = [1, 1]} : vector<6x31xf32> to vector<6x4xf32>
    %153 = vector.extract_strided_slice %152 {offsets = [0, 0], sizes = [6, 1], strides = [1, 1]} : vector<6x4xf32> to vector<6x1xf32>
    %154 = vector.extract_strided_slice %13 {offsets = [0, 0], sizes = [1, 128], strides = [1, 1]} : vector<4x128xf32> to vector<1x128xf32>
    %155 = vector.broadcast %153 : vector<6x1xf32> to vector<6x128xf32>
    %156 = vector.broadcast %154 : vector<1x128xf32> to vector<6x128xf32>
    %157 = arith.mulf %155, %156 : vector<6x128xf32>
    %158 = vector.extract_strided_slice %152 {offsets = [0, 1], sizes = [6, 1], strides = [1, 1]} : vector<6x4xf32> to vector<6x1xf32>
    %159 = vector.extract_strided_slice %13 {offsets = [1, 0], sizes = [1, 128], strides = [1, 1]} : vector<4x128xf32> to vector<1x128xf32>
    %160 = vector.broadcast %158 : vector<6x1xf32> to vector<6x128xf32>
    %161 = vector.broadcast %159 : vector<1x128xf32> to vector<6x128xf32>
    %162 = arith.mulf %160, %161 : vector<6x128xf32>
    %163 = arith.addf %157, %162 : vector<6x128xf32>
    %164 = vector.extract_strided_slice %152 {offsets = [0, 2], sizes = [6, 1], strides = [1, 1]} : vector<6x4xf32> to vector<6x1xf32>
    %165 = vector.extract_strided_slice %13 {offsets = [2, 0], sizes = [1, 128], strides = [1, 1]} : vector<4x128xf32> to vector<1x128xf32>
    %166 = vector.broadcast %164 : vector<6x1xf32> to vector<6x128xf32>
    %167 = vector.broadcast %165 : vector<1x128xf32> to vector<6x128xf32>
    %168 = arith.mulf %166, %167 : vector<6x128xf32>
    %169 = arith.addf %163, %168 : vector<6x128xf32>
    %170 = vector.extract_strided_slice %152 {offsets = [0, 3], sizes = [6, 1], strides = [1, 1]} : vector<6x4xf32> to vector<6x1xf32>
    %171 = vector.extract_strided_slice %13 {offsets = [3, 0], sizes = [1, 128], strides = [1, 1]} : vector<4x128xf32> to vector<1x128xf32>
    %172 = vector.broadcast %170 : vector<6x1xf32> to vector<6x128xf32>
    %173 = vector.broadcast %171 : vector<1x128xf32> to vector<6x128xf32>
    %174 = arith.mulf %172, %173 : vector<6x128xf32>
    %175 = arith.addf %169, %174 : vector<6x128xf32>
    %176 = arith.addf %151, %175 : vector<6x128xf32>
    %177 = vector.extract_strided_slice %1 {offsets = [0, 26], sizes = [6, 4], strides = [1, 1]} : vector<6x31xf32> to vector<6x4xf32>
    %178 = vector.extract_strided_slice %177 {offsets = [0, 0], sizes = [6, 1], strides = [1, 1]} : vector<6x4xf32> to vector<6x1xf32>
    %179 = vector.extract_strided_slice %16 {offsets = [0, 0], sizes = [1, 128], strides = [1, 1]} : vector<4x128xf32> to vector<1x128xf32>
    %180 = vector.broadcast %178 : vector<6x1xf32> to vector<6x128xf32>
    %181 = vector.broadcast %179 : vector<1x128xf32> to vector<6x128xf32>
    %182 = arith.mulf %180, %181 : vector<6x128xf32>
    %183 = vector.extract_strided_slice %177 {offsets = [0, 1], sizes = [6, 1], strides = [1, 1]} : vector<6x4xf32> to vector<6x1xf32>
    %184 = vector.extract_strided_slice %16 {offsets = [1, 0], sizes = [1, 128], strides = [1, 1]} : vector<4x128xf32> to vector<1x128xf32>
    %185 = vector.broadcast %183 : vector<6x1xf32> to vector<6x128xf32>
    %186 = vector.broadcast %184 : vector<1x128xf32> to vector<6x128xf32>
    %187 = arith.mulf %185, %186 : vector<6x128xf32>
    %188 = arith.addf %182, %187 : vector<6x128xf32>
    %189 = vector.extract_strided_slice %177 {offsets = [0, 2], sizes = [6, 1], strides = [1, 1]} : vector<6x4xf32> to vector<6x1xf32>
    %190 = vector.extract_strided_slice %16 {offsets = [2, 0], sizes = [1, 128], strides = [1, 1]} : vector<4x128xf32> to vector<1x128xf32>
    %191 = vector.broadcast %189 : vector<6x1xf32> to vector<6x128xf32>
    %192 = vector.broadcast %190 : vector<1x128xf32> to vector<6x128xf32>
    %193 = arith.mulf %191, %192 : vector<6x128xf32>
    %194 = arith.addf %188, %193 : vector<6x128xf32>
    %195 = vector.extract_strided_slice %177 {offsets = [0, 3], sizes = [6, 1], strides = [1, 1]} : vector<6x4xf32> to vector<6x1xf32>
    %196 = vector.extract_strided_slice %16 {offsets = [3, 0], sizes = [1, 128], strides = [1, 1]} : vector<4x128xf32> to vector<1x128xf32>
    %197 = vector.broadcast %195 : vector<6x1xf32> to vector<6x128xf32>
    %198 = vector.broadcast %196 : vector<1x128xf32> to vector<6x128xf32>
    %199 = arith.mulf %197, %198 : vector<6x128xf32>
    %200 = arith.addf %194, %199 : vector<6x128xf32>
    %201 = arith.addf %176, %200 : vector<6x128xf32>
    %202 = vector.extract_strided_slice %1 {offsets = [0, 30], sizes = [6, 1], strides = [1, 1]} : vector<6x31xf32> to vector<6x1xf32>
    %203 = vector.broadcast %202 : vector<6x1xf32> to vector<6x128xf32>
    %204 = arith.addf %201, %203 : vector<6x128xf32>
    %c0_6 = arith.constant 0 : index
    %c0_7 = arith.constant 0 : index
    %205 = vector.load %arg3[%c0_6, %c0_7] : memref<6x128xf32, #tpu.memory_space<vmem>>, vector<6x128xf32>
    tpu.vector_store %arg3[%c0_6, %c0_7], %204 {strides = array<i32>} : memref<6x128xf32, #tpu.memory_space<vmem>>, vector<6x128xf32>,
    return
  }
  func.func @transform_0(%arg0: i32) -> (i32, i32) {
    %c0_i32 = arith.constant 0 : i32
    %c0_i32_0 = arith.constant 0 : i32
    return %c0_i32, %arg0 : i32, i32
  }
  func.func @transform_1(%arg0: i32) -> (i32, i32) {
    %c0_i32 = arith.constant 0 : i32
    %c0_i32_0 = arith.constant 0 : i32
    %c0_i32_1 = arith.constant 0 : i32
    return %c0_i32, %c0_i32_0 : i32, i32
  }
  func.func @transform_2(%arg0: i32) -> (i32, i32) {
    %c0_i32 = arith.constant 0 : i32
    %c0_i32_0 = arith.constant 0 : i32
    return %c0_i32, %arg0 : i32, i32
  }
}

</mosaic_0001>

<llo_original>
// kernel: forward.1
$region0: #{forward.1}
  #allocation0 [shape = 'u32[]', space=smem, size = 0x4, offset = 0x4, fixed_abs, tag = 'smem constant byte address 0x4 - core index']
  #allocation1 [shape = 'u32[144,128]{1,0:T(1,128)}', space=vmem, size = 0x12000, scoped, tag = 'internal scratch']
  %s0 = inlined_call_operand.vmem [shape: f32[10,128], index: 0, kind: input, shape index: {}]
  %s1 = inlined_call_operand.vmem [shape: f32[6,31], index: 1, kind: input, shape index: {}]
  %s2 = inlined_call_operand.vmem [shape: f32[6,128], index: 2, kind: output, shape index: {}]
  %s3 = sld [smem:[#allocation0]]
  $region18: #{forward.1} parent=0
    _
  %s5 = ssub.s32 1, %s3
  %s6 = scalar_select 0, %s5, %s3
  // Predicated region
  $region2: #{forward.1} parent=0 // pred_check
    _
  $region3: #{forward.1} parent=0 // pred_check_branch
    %8 = sbr.rel (0) target = $region5
  $region4: #{forward.1} parent=0 // pred_region
    _
  $region5: #{forward.1} parent=0 // pred_fallthru
    _
  // Predicated region
  $region6: #{forward.1} parent=0 // pred_check
    _
  $region7: #{forward.1} parent=0 // pred_check_branch
    %10 = sbr.rel (0) target = $region9
  $region8: #{forward.1} parent=0 // pred_region
    _
  $region9: #{forward.1} parent=0 // pred_fallthru
    _
  %v11 = vld [vmem:[%s0] sm:$0xff]
  %v12 = vld [vmem:[%s0 + $0x8] sm:$0x3]
  %v13 = vld [vmem:[%s1] sm:$0x3f]
  %v14 = vmin.f32 %v11, 0.0
  %v15 = vmin.f32 %v12, 0.0
  %v16 = vmul.f32 %v14, %v14
  %v17 = vmul.f32 %v15, %v15
  %v18 = vmul.f32 %v11, %v11
  %v19 = vmul.f32 %v12, %v12
  %v20 = vmax.f32 %v18, 0.0
  %v21 = vmax.f32 %v19, 0.0
  %v22 = vmul.f32 %v20, %v20
  %v23 = vmul.f32 %v21, %v21
  %v24 = vmax.f32 %v11, 0.0
  %v25 = vmul.f32 %v24, %v24
  %27 = vset.pattern.permute.xlu0 0
  %28 = vperm.xlu0 %27, %v13
  %v29 = vpop.permute.xlu0 %28
  %v31 = vlaneseq
  %v32 = vshrl.u32 %v31, 7
  %v33 = vsub.s32 4, %v32
  %v34 = vrot.slane %v11, %v33
  %v35 = vmul.f32 %v29, %v34
  %36 = vset.pattern.permute.xlu0 1
  %37 = vperm.xlu0 %36, %v13
  %v38 = vpop.permute.xlu0 %37
  %v40 = vlaneseq
  %v41 = vshrl.u32 %v40, 7
  %v42 = vsub.s32 5, %v41
  %v43 = vrot.slane %v11, %v42
  %v44 = vmul.f32 %v38, %v43
  %v45 = vadd.f32 %v35, %v44
  %46 = vset.pattern.permute.xlu0 2
  %47 = vperm.xlu0 %46, %v13
  %v48 = vpop.permute.xlu0 %47
  %v50 = vlaneseq
  %v51 = vshrl.u32 %v50, 7
  %v52 = vsub.s32 6, %v51
  %v53 = vrot.slane %v11, %v52
  %v54 = vmul.f32 %v48, %v53
  %v55 = vadd.f32 %v45, %v54
  %56 = vset.pattern.permute.xlu0 3
  %57 = vperm.xlu0 %56, %v13
  %v58 = vpop.permute.xlu0 %57
  %v60 = vlaneseq
  %v61 = vshrl.u32 %v60, 7
  %v62 = vsub.s32 7, %v61
  %v63 = vrot.slane %v11, %v62
  %v64 = vmul.f32 %v58, %v63
  %v65 = vadd.f32 %v55, %v64
  %66 = vset.pattern.permute.xlu0 4
  %67 = vperm.xlu0 %66, %v13
  %v68 = vpop.permute.xlu0 %67
  %v70 = vlaneseq
  %v71 = vshrl.u32 %v70, 7
  %v72 = vsub.s32 0, %v71
  %v73 = vrot.slane %v12, %v72
  %v74 = vmul.f32 %v68, %v73
  %v75 = vadd.f32 %v65, %v74
  %76 = vset.pattern.permute.xlu0 5
  %77 = vperm.xlu0 %76, %v13
  %v78 = vpop.permute.xlu0 %77
  %v80 = vlaneseq
  %v81 = vshrl.u32 %v80, 7
  %v82 = vsub.s32 1, %v81
  %v83 = vrot.slane %v12, %v82
  %v84 = vmul.f32 %v78, %v83
  %v85 = vadd.f32 %v75, %v84
  %86 = vset.pattern.permute.xlu0 6
  %87 = vperm.xlu0 %86, %v13
  %v88 = vpop.permute.xlu0 %87
  %v90 = vlaneseq
  %v91 = vshrl.u32 %v90, 7
  %v92 = vsub.s32 4, %v91
  %v93 = vrot.slane %v16, %v92
  %v94 = vmul.f32 %v88, %v93
  %95 = vset.pattern.permute.xlu0 7
  %96 = vperm.xlu0 %95, %v13
  %v97 = vpop.permute.xlu0 %96
  %v99 = vlaneseq
  %v100 = vshrl.u32 %v99, 7
  %v101 = vsub.s32 5, %v100
  %v102 = vrot.slane %v16, %v101
  %v103 = vmul.f32 %v97, %v102
  %v104 = vadd.f32 %v94, %v103
  %105 = vset.pattern.permute.xlu0 8
  %106 = vperm.xlu0 %105, %v13
  %v107 = vpop.permute.xlu0 %106
  %v109 = vlaneseq
  %v110 = vshrl.u32 %v109, 7
  %v111 = vsub.s32 6, %v110
  %v112 = vrot.slane %v16, %v111
  %v113 = vmul.f32 %v107, %v112
  %v114 = vadd.f32 %v104, %v113
  %115 = vset.pattern.permute.xlu0 9
  %116 = vperm.xlu0 %115, %v13
  %v117 = vpop.permute.xlu0 %116
  %v119 = vlaneseq
  %v120 = vshrl.u32 %v119, 7
  %v121 = vsub.s32 7, %v120
  %v122 = vrot.slane %v16, %v121
  %v123 = vmul.f32 %v117, %v122
  %v124 = vadd.f32 %v114, %v123
  %125 = vset.pattern.permute.xlu0 10
  %126 = vperm.xlu0 %125, %v13
  %v127 = vpop.permute.xlu0 %126
  %v129 = vlaneseq
  %v130 = vshrl.u32 %v129, 7
  %v131 = vsub.s32 0, %v130
  %v132 = vrot.slane %v17, %v131
  %v133 = vmul.f32 %v127, %v132
  %v134 = vadd.f32 %v124, %v133
  %135 = vset.pattern.permute.xlu0 11
  %136 = vperm.xlu0 %135, %v13
  %v137 = vpop.permute.xlu0 %136
  %v139 = vlaneseq
  %v140 = vshrl.u32 %v139, 7
  %v141 = vsub.s32 1, %v140
  %v142 = vrot.slane %v17, %v141
  %v143 = vmul.f32 %v137, %v142
  %v144 = vadd.f32 %v134, %v143
  %v145 = vadd.f32 %v85, %v144
  %146 = vset.pattern.permute.xlu0 12
  %147 = vperm.xlu0 %146, %v13
  %v148 = vpop.permute.xlu0 %147
  %v150 = vlaneseq
  %v151 = vshrl.u32 %v150, 7
  %v152 = vsub.s32 4, %v151
  %v153 = vrot.slane %v22, %v152
  %v154 = vmul.f32 %v148, %v153
  %155 = vset.pattern.permute.xlu0 13
  %156 = vperm.xlu0 %155, %v13
  %v157 = vpop.permute.xlu0 %156
  %v159 = vlaneseq
  %v160 = vshrl.u32 %v159, 7
  %v161 = vsub.s32 5, %v160
  %v162 = vrot.slane %v22, %v161
  %v163 = vmul.f32 %v157, %v162
  %v164 = vadd.f32 %v154, %v163
  %165 = vset.pattern.permute.xlu0 14
  %166 = vperm.xlu0 %165, %v13
  %v167 = vpop.permute.xlu0 %166
  %v169 = vlaneseq
  %v170 = vshrl.u32 %v169, 7
  %v171 = vsub.s32 6, %v170
  %v172 = vrot.slane %v22, %v171
  %v173 = vmul.f32 %v167, %v172
  %v174 = vadd.f32 %v164, %v173
  %175 = vset.pattern.permute.xlu0 15
  %176 = vperm.xlu0 %175, %v13
  %v177 = vpop.permute.xlu0 %176
  %v179 = vlaneseq
  %v180 = vshrl.u32 %v179, 7
  %v181 = vsub.s32 7, %v180
  %v182 = vrot.slane %v22, %v181
  %v183 = vmul.f32 %v177, %v182
  %v184 = vadd.f32 %v174, %v183
  %185 = vset.pattern.permute.xlu0 16
  %186 = vperm.xlu0 %185, %v13
  %v187 = vpop.permute.xlu0 %186
  %v189 = vlaneseq
  %v190 = vshrl.u32 %v189, 7
  %v191 = vsub.s32 0, %v190
  %v192 = vrot.slane %v23, %v191
  %v193 = vmul.f32 %v187, %v192
  %v194 = vadd.f32 %v184, %v193
  %195 = vset.pattern.permute.xlu0 17
  %196 = vperm.xlu0 %195, %v13
  %v197 = vpop.permute.xlu0 %196
  %v199 = vlaneseq
  %v200 = vshrl.u32 %v199, 7
  %v201 = vsub.s32 1, %v200
  %v202 = vrot.slane %v23, %v201
  %v203 = vmul.f32 %v197, %v202
  %v204 = vadd.f32 %v194, %v203
  %v205 = vadd.f32 %v145, %v204
  %206 = vset.pattern.permute.xlu0 18
  %207 = vperm.xlu0 %206, %v13
  %v208 = vpop.permute.xlu0 %207
  %v210 = vlaneseq
  %v211 = vshrl.u32 %v210, 7
  %v212 = vsub.s32 0, %v211
  %v213 = vrot.slane %v11, %v212
  %v214 = vmul.f32 %v208, %v213
  %215 = vset.pattern.permute.xlu0 19
  %216 = vperm.xlu0 %215, %v13
  %v217 = vpop.permute.xlu0 %216
  %v219 = vlaneseq
  %v220 = vshrl.u32 %v219, 7
  %v221 = vsub.s32 1, %v220
  %v222 = vrot.slane %v11, %v221
  %v223 = vmul.f32 %v217, %v222
  %v224 = vadd.f32 %v214, %v223
  %225 = vset.pattern.permute.xlu0 20
  %226 = vperm.xlu0 %225, %v13
  %v227 = vpop.permute.xlu0 %226
  %v229 = vlaneseq
  %v230 = vshrl.u32 %v229, 7
  %v231 = vsub.s32 2, %v230
  %v232 = vrot.slane %v11, %v231
  %v233 = vmul.f32 %v227, %v232
  %v234 = vadd.f32 %v224, %v233
  %235 = vset.pattern.permute.xlu0 21
  %236 = vperm.xlu0 %235, %v13
  %v237 = vpop.permute.xlu0 %236
  %v239 = vlaneseq
  %v240 = vshrl.u32 %v239, 7
  %v241 = vsub.s32 3, %v240
  %v242 = vrot.slane %v11, %v241
  %v243 = vmul.f32 %v237, %v242
  %v244 = vadd.f32 %v234, %v243
  %v245 = vadd.f32 %v205, %v244
  %246 = vset.pattern.permute.xlu0 22
  %247 = vperm.xlu0 %246, %v13
  %v248 = vpop.permute.xlu0 %247
  %v250 = vlaneseq
  %v251 = vshrl.u32 %v250, 7
  %v252 = vsub.s32 0, %v251
  %v253 = vrot.slane %v16, %v252
  %v254 = vmul.f32 %v248, %v253
  %255 = vset.pattern.permute.xlu0 23
  %256 = vperm.xlu0 %255, %v13
  %v257 = vpop.permute.xlu0 %256
  %v259 = vlaneseq
  %v260 = vshrl.u32 %v259, 7
  %v261 = vsub.s32 1, %v260
  %v262 = vrot.slane %v16, %v261
  %v263 = vmul.f32 %v257, %v262
  %v264 = vadd.f32 %v254, %v263
  %265 = vset.pattern.permute.xlu0 24
  %266 = vperm.xlu0 %265, %v13
  %v267 = vpop.permute.xlu0 %266
  %v269 = vlaneseq
  %v270 = vshrl.u32 %v269, 7
  %v271 = vsub.s32 2, %v270
  %v272 = vrot.slane %v16, %v271
  %v273 = vmul.f32 %v267, %v272
  %v274 = vadd.f32 %v264, %v273
  %275 = vset.pattern.permute.xlu0 25
  %276 = vperm.xlu0 %275, %v13
  %v277 = vpop.permute.xlu0 %276
  %v279 = vlaneseq
  %v280 = vshrl.u32 %v279, 7
  %v281 = vsub.s32 3, %v280
  %v282 = vrot.slane %v16, %v281
  %v283 = vmul.f32 %v277, %v282
  %v284 = vadd.f32 %v274, %v283
  %v285 = vadd.f32 %v245, %v284
  %286 = vset.pattern.permute.xlu0 26
  %287 = vperm.xlu0 %286, %v13
  %v288 = vpop.permute.xlu0 %287
  %v290 = vlaneseq
  %v291 = vshrl.u32 %v290, 7
  %v292 = vsub.s32 0, %v291
  %v293 = vrot.slane %v25, %v292
  %v294 = vmul.f32 %v288, %v293
  %295 = vset.pattern.permute.xlu0 27
  %296 = vperm.xlu0 %295, %v13
  %v297 = vpop.permute.xlu0 %296
  %v299 = vlaneseq
  %v300 = vshrl.u32 %v299, 7
  %v301 = vsub.s32 1, %v300
  %v302 = vrot.slane %v25, %v301
  %v303 = vmul.f32 %v297, %v302
  %v304 = vadd.f32 %v294, %v303
  %305 = vset.pattern.permute.xlu0 28
  %306 = vperm.xlu0 %305, %v13
  %v307 = vpop.permute.xlu0 %306
  %v309 = vlaneseq
  %v310 = vshrl.u32 %v309, 7
  %v311 = vsub.s32 2, %v310
  %v312 = vrot.slane %v25, %v311
  %v313 = vmul.f32 %v307, %v312
  %v314 = vadd.f32 %v304, %v313
  %315 = vset.pattern.permute.xlu0 29
  %316 = vperm.xlu0 %315, %v13
  %v317 = vpop.permute.xlu0 %316
  %v319 = vlaneseq
  %v320 = vshrl.u32 %v319, 7
  %v321 = vsub.s32 3, %v320
  %v322 = vrot.slane %v25, %v321
  %v323 = vmul.f32 %v317, %v322
  %v324 = vadd.f32 %v314, %v323
  %v325 = vadd.f32 %v285, %v324
  %326 = vset.pattern.permute.xlu0 30
  %327 = vperm.xlu0 %326, %v13
  %v328 = vpop.permute.xlu0 %327
  %v330 = vadd.f32 %v325, %v328
  %331 = vst [vmem:[%s2] sm:$0x3f] %v330
  // Predicated region
  $region10: #{forward.1} parent=0 // pred_check
    _
  $region11: #{forward.1} parent=0 // pred_check_branch
    %333 = sbr.rel (0) target = $region13
  $region12: #{forward.1} parent=0 // pred_region
    _
  $region13: #{forward.1} parent=0 // pred_fallthru
    _
  // Predicated region
  $region14: #{forward.1} parent=0 // pred_check
    _
  $region15: #{forward.1} parent=0 // pred_check_branch
    %335 = sbr.rel (0) target = $region17
  $region16: #{forward.1} parent=0 // pred_region
    _
  $region17: #{forward.1} parent=0 // pred_fallthru
    _

</llo_original>
